<compile_context>
chip_gen: v7x
topology: tpu7x:2x2x1
jax: 0.10.0
libtpu: 0.0.40
codegen_flags: <defaults>
</compile_context>

<pallas_src>
import functools

import jax
import jax.numpy as jnp
from jax.experimental import pallas as pl
from jax.experimental.pallas import tpu as pltpu


def _round_up(n, m):
    return ((n + m - 1) // m) * m


def _policy_kernel(x_ref,
                   w1_ref, b1_ref,
                   w2_ref, b2_ref,
                   w3_ref, b3_ref,
                   wm_ref, bm_ref,
                   mean_ref, *, tanh_in_bf16):
    """One (TB, input_dim) batch tile -> (TB, A) mean tile.

    Weights/biases are small and VMEM-resident across all grid steps (constant
    index_maps). All matmuls accumulate in f32; bias-add is in f32. tanh runs in
    bf16 only when tanh_in_bf16 (v6e/v7x bf16-EUP path), otherwise in f32.
    """
    cdt = w2_ref.dtype  # hidden-layer compute dtype (f32 or bf16)

    def act(pre_f32):
        if tanh_in_bf16:
            # bf16 EUP (v6e/v7x): ~2x transcendental throughput, output feeds next dot.
            return jnp.tanh(pre_f32.astype(jnp.bfloat16))
        return jnp.tanh(pre_f32).astype(cdt)

    x = x_ref[...]  # f32; first dot stays f32 (K=input_dim is tiny, avoids quantizing x)
    h = act(jnp.dot(x, w1_ref[...], preferred_element_type=jnp.float32) + b1_ref[...])
    h = act(jnp.dot(h, w2_ref[...], preferred_element_type=jnp.float32) + b2_ref[...])
    h = act(jnp.dot(h, w3_ref[...], preferred_element_type=jnp.float32) + b3_ref[...])
    mean = jnp.dot(h, wm_ref[...], preferred_element_type=jnp.float32) + bm_ref[...]
    mean_ref[...] = mean.astype(mean_ref.dtype)


@functools.partial(jax.jit,
                   static_argnames=("compute_dtype", "block_b", "tanh_in_bf16"))
def _policy_forward(x, params, *, compute_dtype, block_b, tanh_in_bf16):
    B, input_dim = x.shape
    w1, b1, w2, b2, w3, b3, wm, bm, log_std = params
    A = wm.shape[1]

    cdt = jnp.dtype(compute_dtype)
    assert block_b % 8 == 0

    # ---- batch tiling: no padding of x; Pallas handles the ragged last block ----
    tb = min(block_b, _round_up(B, 8))
    # v7x megacore: keep >= 2 grid steps when the batch is big enough to split.
    if B >= 16 and pl.cdiv(B, tb) < 2:
        tb = max(8, _round_up(pl.cdiv(B, 2), 8))
    num_tiles = pl.cdiv(B, tb)

    # ---- weights: layer 1 stays f32 (f32 first dot); hidden layers in compute_dtype.
    w1c = w1.astype(jnp.float32)
    w2c = w2.astype(cdt)
    w3c = w3.astype(cdt)
    wmc = wm.astype(cdt)
    b1_2d = b1.reshape(1, -1).astype(jnp.float32)
    b2_2d = b2.reshape(1, -1).astype(jnp.float32)
    b3_2d = b3.reshape(1, -1).astype(jnp.float32)
    bm_2d = bm.reshape(1, -1).astype(jnp.float32)

    resident = lambda shape: pl.BlockSpec(shape, lambda i: (0, 0))  # VMEM-resident

    # ---- VMEM budget: x / out / intermediates are lane-padded to 128 in VMEM. ----
    weight_bytes = 2 * sum(int(a.size) * a.dtype.itemsize
                           for a in (w1c, w2c, w3c, wmc, b1_2d, b2_2d, b3_2d, bm_2d))
    act_bytes = 10 * tb * 128 * 4          # 2x x-in + 2x out + f32 intermediates
    vmem_limit = int(min(64 * 1024 * 1024,
                         max(4 * 1024 * 1024, weight_bytes + act_bytes + (2 << 20))))

    flops = 2 * B * (input_dim * 64 + 64 * 128 + 128 * 64 + 64 * A)
    transcendentals = B * (64 + 128 + 64)
    bytes_accessed = (int(x.size) * 4 + B * A * 4
                      + sum(int(a.size) * a.dtype.itemsize
                            for a in (w1c, w2c, w3c, wmc, b1_2d, b2_2d, b3_2d, bm_2d)))

    kernel = functools.partial(_policy_kernel, tanh_in_bf16=tanh_in_bf16)

    action_mean = pl.pallas_call(
        kernel,
        out_shape=jax.ShapeDtypeStruct((B, A), jnp.float32),
        grid=(num_tiles,),
        in_specs=[
            pl.BlockSpec((tb, input_dim), lambda i: (i, 0)),   # streamed batch tile (f32)
            resident(w1c.shape), resident(b1_2d.shape),
            resident(w2c.shape), resident(b2_2d.shape),
            resident(w3c.shape), resident(b3_2d.shape),
            resident(wmc.shape), resident(bm_2d.shape),
        ],
        out_specs=pl.BlockSpec((tb, A), lambda i: (i, 0)),      # exact-width output
        compiler_params=pltpu.CompilerParams(
            dimension_semantics=("parallel",),                  # megacore on v7x
            vmem_limit_bytes=vmem_limit,
        ),
        cost_estimate=pl.CostEstimate(flops=int(flops),
                                      transcendentals=int(transcendentals),
                                      bytes_accessed=int(bytes_accessed)),
    )(x, w1c, b1_2d, w2c, b2_2d, w3c, b3_2d, wmc, bm_2d)

    action_std = jnp.exp(log_std)          # batch-independent: plain JAX, not in-kernel
    return action_mean, action_std


def policy_network_forward(x, params, *, compute_dtype=jnp.bfloat16, block_b=4096,
                           bf16_tanh=None):
    """x: (B, input_dim) f32. Returns (action_mean (B, A) f32, action_std (A,) f32).

    compute_dtype: matmul operand dtype for the hidden layers (bf16 default for MXU
    throughput; f32 accumulation always). bf16_tanh: run tanh in bf16 (auto-detects
    v6e/v7x which have a bf16 EUP; v5e falls back to f32 tanh).
    """
    cdt = jnp.dtype(compute_dtype)
    if bf16_tanh is None:
        try:
            kind = jax.devices()[0].device_kind.lower()
        except Exception:
            kind = ""
        bf16_tanh = ("v6" in kind) or ("v7" in kind)
    tanh_in_bf16 = bool(bf16_tanh) and cdt == jnp.dtype(jnp.bfloat16)
    return _policy_forward(x, params, compute_dtype=cdt, block_b=int(block_b),
                           tanh_in_bf16=tanh_in_bf16)


def init_params(key, input_dim, action_dim):
    """Deterministic init mimicking nn.Linear default (uniform +/- 1/sqrt(fan_in)).
    Weights are stored as (in_features, out_features)."""
    dims = [(input_dim, 64), (64, 128), (128, 64), (64, action_dim)]
    params = []
    for (fan_in, fan_out) in dims:
        key, kw, kb = jax.random.split(key, 3)
        bound = 1.0 / jnp.sqrt(fan_in)
        w = jax.random.uniform(kw, (fan_in, fan_out), jnp.float32, -bound, bound)
        b = jax.random.uniform(kb, (fan_out,), jnp.float32, -bound, bound)
        params += [w, b]
    log_std = jnp.zeros((action_dim,), jnp.float32)  # nn.Parameter(torch.zeros(action_dim))
    params.append(log_std)
    return tuple(params)


def reference_forward(x, params):
    w1, b1, w2, b2, w3, b3, wm, bm, log_std = params
    h = jnp.tanh(x @ w1 + b1)
    h = jnp.tanh(h @ w2 + b2)
    h = jnp.tanh(h @ w3 + b3)
    return h @ wm + bm, jnp.exp(log_std)


if __name__ == "__main__":
    key = jax.random.PRNGKey(0)
    batch, input_dim, action_dim = 4, 16, 8

    key, kx = jax.random.split(key)
    x = jax.random.normal(kx, (batch, input_dim), jnp.float32)
    params = init_params(key, input_dim, action_dim)

    ref_mean, ref_std = reference_forward(x, params)

    # f32 path (bit-faithful to the PyTorch module semantics).
    mean, std = jax.block_until_ready(
        policy_network_forward(x, params, compute_dtype=jnp.float32))
    assert mean.shape == (batch, action_dim)
    assert std.shape == (action_dim,)
    assert jnp.allclose(mean, ref_mean, atol=1e-5, rtol=1e-5)
    assert jnp.allclose(std, ref_std, atol=1e-6, rtol=1e-6)

    # Default perf path: bf16 hidden-layer matmuls (f32 accumulation), f32 first dot.
    mean_bf, std_bf = jax.block_until_ready(policy_network_forward(x, params))
    assert mean_bf.shape == (batch, action_dim)
    assert jnp.allclose(mean_bf, ref_mean, atol=5e-2, rtol=5e-2)
    assert jnp.allclose(std_bf, ref_std, atol=1e-6, rtol=1e-6)

    print("KERNEL_OK")
</pallas_src>

<mosaic_0001>
module attributes {stable_mosaic.version = 11 : i64} {
  func.func @_policy_kernel(%arg0: i32, %arg1: memref<8x16xf32, #tpu.memory_space<vmem>>, %arg2: memref<16x64xf32, #tpu.memory_space<vmem>>, %arg3: memref<1x64xf32, #tpu.memory_space<vmem>>, %arg4: memref<64x128xf32, #tpu.memory_space<vmem>>, %arg5: memref<1x128xf32, #tpu.memory_space<vmem>>, %arg6: memref<128x64xf32, #tpu.memory_space<vmem>>, %arg7: memref<1x64xf32, #tpu.memory_space<vmem>>, %arg8: memref<64x8xf32, #tpu.memory_space<vmem>>, %arg9: memref<1x8xf32, #tpu.memory_space<vmem>>, %arg10: memref<8x8xf32, #tpu.memory_space<vmem>>) attributes {dimension_semantics = [#tpu.dimension_semantics<parallel>], iteration_bounds = array<i64: 1>, scalar_prefetch = 0 : i64, scratch_operands = 0 : i64, tpu.core_type = #tpu.core_type<tc>, window_params = [{transform_indices = @transform_0, window_bounds = array<i64: 8, 16>}, {pipeline_mode = #tpu.pipeline_mode<synchronous>, transform_indices = @transform_1, window_bounds = array<i64: 16, 64>}, {pipeline_mode = #tpu.pipeline_mode<synchronous>, transform_indices = @transform_2, window_bounds = array<i64: 1, 64>}, {pipeline_mode = #tpu.pipeline_mode<synchronous>, transform_indices = @transform_3, window_bounds = array<i64: 64, 128>}, {pipeline_mode = #tpu.pipeline_mode<synchronous>, transform_indices = @transform_4, window_bounds = array<i64: 1, 128>}, {pipeline_mode = #tpu.pipeline_mode<synchronous>, transform_indices = @transform_5, window_bounds = array<i64: 128, 64>}, {pipeline_mode = #tpu.pipeline_mode<synchronous>, transform_indices = @transform_6, window_bounds = array<i64: 1, 64>}, {pipeline_mode = #tpu.pipeline_mode<synchronous>, transform_indices = @transform_7, window_bounds = array<i64: 64, 8>}, {pipeline_mode = #tpu.pipeline_mode<synchronous>, transform_indices = @transform_8, window_bounds = array<i64: 1, 8>}, {transform_indices = @transform_9, window_bounds = array<i64: 8, 8>}]} {
    %c0 = arith.constant 0 : index
    %c0_0 = arith.constant 0 : index
    %0 = vector.load %arg1[%c0, %c0_0] : memref<8x16xf32, #tpu.memory_space<vmem>>, vector<8x16xf32>
    %c0_1 = arith.constant 0 : index
    %c0_2 = arith.constant 0 : index
    %1 = vector.load %arg2[%c0_1, %c0_2] : memref<16x64xf32, #tpu.memory_space<vmem>>, vector<16x64xf32>
    %cst = arith.constant dense<0.000000e+00> : vector<8x64xf32>
    %2 = tpu.matmul %0, %1, %cst {dimension_numbers = #tpu.dot_dimension_numbers<[1], [0], [0], [1], [0, 0, 1, 1], [], []>} : vector<8x16xf32>, vector<16x64xf32>, vector<8x64xf32> -> vector<8x64xf32>
    %c0_3 = arith.constant 0 : index
    %c0_4 = arith.constant 0 : index
    %3 = vector.load %arg3[%c0_3, %c0_4] : memref<1x64xf32, #tpu.memory_space<vmem>>, vector<1x64xf32>
    %4 = vector.broadcast %3 : vector<1x64xf32> to vector<8x64xf32>
    %5 = arith.addf %2, %4 : vector<8x64xf32>
    %6 = math.tanh %5 : vector<8x64xf32>
    %c0_5 = arith.constant 0 : index
    %c0_6 = arith.constant 0 : index
    %7 = vector.load %arg4[%c0_5, %c0_6] : memref<64x128xf32, #tpu.memory_space<vmem>>, vector<64x128xf32>
    %cst_7 = arith.constant dense<0.000000e+00> : vector<8x128xf32>
    %8 = tpu.matmul %6, %7, %cst_7 {dimension_numbers = #tpu.dot_dimension_numbers<[1], [0], [0], [1], [0, 0, 1, 1], [], []>} : vector<8x64xf32>, vector<64x128xf32>, vector<8x128xf32> -> vector<8x128xf32>
    %c0_8 = arith.constant 0 : index
    %c0_9 = arith.constant 0 : index
    %9 = vector.load %arg5[%c0_8, %c0_9] : memref<1x128xf32, #tpu.memory_space<vmem>>, vector<1x128xf32>
    %10 = vector.broadcast %9 : vector<1x128xf32> to vector<8x128xf32>
    %11 = arith.addf %8, %10 : vector<8x128xf32>
    %12 = math.tanh %11 : vector<8x128xf32>
    %c0_10 = arith.constant 0 : index
    %c0_11 = arith.constant 0 : index
    %13 = vector.load %arg6[%c0_10, %c0_11] : memref<128x64xf32, #tpu.memory_space<vmem>>, vector<128x64xf32>
    %cst_12 = arith.constant dense<0.000000e+00> : vector<8x64xf32>
    %14 = tpu.matmul %12, %13, %cst_12 {dimension_numbers = #tpu.dot_dimension_numbers<[1], [0], [0], [1], [0, 0, 1, 1], [], []>} : vector<8x128xf32>, vector<128x64xf32>, vector<8x64xf32> -> vector<8x64xf32>
    %c0_13 = arith.constant 0 : index
    %c0_14 = arith.constant 0 : index
    %15 = vector.load %arg7[%c0_13, %c0_14] : memref<1x64xf32, #tpu.memory_space<vmem>>, vector<1x64xf32>
    %16 = vector.broadcast %15 : vector<1x64xf32> to vector<8x64xf32>
    %17 = arith.addf %14, %16 : vector<8x64xf32>
    %18 = math.tanh %17 : vector<8x64xf32>
    %c0_15 = arith.constant 0 : index
    %c0_16 = arith.constant 0 : index
    %19 = vector.load %arg8[%c0_15, %c0_16] : memref<64x8xf32, #tpu.memory_space<vmem>>, vector<64x8xf32>
    %cst_17 = arith.constant dense<0.000000e+00> : vector<8x8xf32>
    %20 = tpu.matmul %18, %19, %cst_17 {dimension_numbers = #tpu.dot_dimension_numbers<[1], [0], [0], [1], [0, 0, 1, 1], [], []>} : vector<8x64xf32>, vector<64x8xf32>, vector<8x8xf32> -> vector<8x8xf32>
    %c0_18 = arith.constant 0 : index
    %c0_19 = arith.constant 0 : index
    %21 = vector.load %arg9[%c0_18, %c0_19] : memref<1x8xf32, #tpu.memory_space<vmem>>, vector<1x8xf32>
    %22 = vector.broadcast %21 : vector<1x8xf32> to vector<8x8xf32>
    %23 = arith.addf %20, %22 : vector<8x8xf32>
    %c0_20 = arith.constant 0 : index
    %c0_21 = arith.constant 0 : index
    %24 = vector.load %arg10[%c0_20, %c0_21] : memref<8x8xf32, #tpu.memory_space<vmem>>, vector<8x8xf32>
    tpu.vector_store %arg10[%c0_20, %c0_21], %23 {strides = array<i32>} : memref<8x8xf32, #tpu.memory_space<vmem>>, vector<8x8xf32>,
    return
  }
  func.func @transform_0(%arg0: i32) -> (i32, i32) {
    %c0_i32 = arith.constant 0 : i32
    %c0_i32_0 = arith.constant 0 : i32
    return %arg0, %c0_i32 : i32, i32
  }
  func.func @transform_1(%arg0: i32) -> (i32, i32) {
    %c0_i32 = arith.constant 0 : i32
    %c0_i32_0 = arith.constant 0 : i32
    %c0_i32_1 = arith.constant 0 : i32
    return %c0_i32, %c0_i32_0 : i32, i32
  }
  func.func @transform_2(%arg0: i32) -> (i32, i32) {
    %c0_i32 = arith.constant 0 : i32
    %c0_i32_0 = arith.constant 0 : i32
    %c0_i32_1 = arith.constant 0 : i32
    return %c0_i32, %c0_i32_0 : i32, i32
  }
  func.func @transform_3(%arg0: i32) -> (i32, i32) {
    %c0_i32 = arith.constant 0 : i32
    %c0_i32_0 = arith.constant 0 : i32
    %c0_i32_1 = arith.constant 0 : i32
    return %c0_i32, %c0_i32_0 : i32, i32
  }
  func.func @transform_4(%arg0: i32) -> (i32, i32) {
    %c0_i32 = arith.constant 0 : i32
    %c0_i32_0 = arith.constant 0 : i32
    %c0_i32_1 = arith.constant 0 : i32
    return %c0_i32, %c0_i32_0 : i32, i32
  }
  func.func @transform_5(%arg0: i32) -> (i32, i32) {
    %c0_i32 = arith.constant 0 : i32
    %c0_i32_0 = arith.constant 0 : i32
    %c0_i32_1 = arith.constant 0 : i32
    return %c0_i32, %c0_i32_0 : i32, i32
  }
  func.func @transform_6(%arg0: i32) -> (i32, i32) {
    %c0_i32 = arith.constant 0 : i32
    %c0_i32_0 = arith.constant 0 : i32
    %c0_i32_1 = arith.constant 0 : i32
    return %c0_i32, %c0_i32_0 : i32, i32
  }
  func.func @transform_7(%arg0: i32) -> (i32, i32) {
    %c0_i32 = arith.constant 0 : i32
    %c0_i32_0 = arith.constant 0 : i32
    %c0_i32_1 = arith.constant 0 : i32
    return %c0_i32, %c0_i32_0 : i32, i32
  }
  func.func @transform_8(%arg0: i32) -> (i32, i32) {
    %c0_i32 = arith.constant 0 : i32
    %c0_i32_0 = arith.constant 0 : i32
    %c0_i32_1 = arith.constant 0 : i32
    return %c0_i32, %c0_i32_0 : i32, i32
  }
  func.func @transform_9(%arg0: i32) -> (i32, i32) {
    %c0_i32 = arith.constant 0 : i32
    %c0_i32_0 = arith.constant 0 : i32
    return %arg0, %c0_i32 : i32, i32
  }
}

</mosaic_0001>

<llo_original>
// kernel: _policy_forward.1
$region0: #{_policy_forward.1}
  #allocation0 [shape = 'u32[]', space=smem, size = 0x4, offset = 0x4, fixed_abs, tag = 'smem constant byte address 0x4 - core index']
  #allocation1 [shape = 'u32[144,128]{1,0:T(1,128)}', space=vmem, size = 0x12000, scoped, tag = 'internal scratch']
  %s0 = inlined_call_operand.vmem [shape: f32[4,16], index: 0, kind: input, shape index: {}]
  %s1 = inlined_call_operand.vmem [shape: f32[16,64], index: 1, kind: input, shape index: {}]
  %s2 = inlined_call_operand.vmem [shape: f32[1,64], index: 2, kind: input, shape index: {}]
  %s3 = inlined_call_operand.vmem [shape: f32[64,128], index: 3, kind: input, shape index: {}]
  %s4 = inlined_call_operand.vmem [shape: f32[1,128], index: 4, kind: input, shape index: {}]
  %s5 = inlined_call_operand.vmem [shape: f32[128,64], index: 5, kind: input, shape index: {}]
  %s6 = inlined_call_operand.vmem [shape: f32[1,64], index: 6, kind: input, shape index: {}]
  %s7 = inlined_call_operand.vmem [shape: f32[64,8], index: 7, kind: input, shape index: {}]
  %s8 = inlined_call_operand.vmem [shape: f32[1,8], index: 8, kind: input, shape index: {}]
  %s9 = inlined_call_operand.hbm [shape: f32[4,8], index: 9, kind: output, shape index: {}]
  %s10 = sld [smem:[#allocation0]]
  $region46: #{_policy_forward.1} parent=0
    _
  %s12 = ssub.s32 1, %s10
  %s13 = scalar_select 0, %s12, %s10
  $region1: #{_policy_forward.1} parent=0
    #allocation2 [shape = 'u8[4096]{0}', space=vmem, size = 0x1000, scoped, tag = 'output window, operand 0, single buffered']
    #allocation3 [shape = 's32[1]{0}', space=sflag, size = 0x4, scoped, tag = 'scoped memory for _policy_forward.1']
    %14 = vsyncpa [#allocation3], 0
    // Predicated region
    $region2: #{_policy_forward.1} parent=1 // pred_check
      _
    $region3: #{_policy_forward.1} parent=1 // pred_check_branch
      %16 = sbr.rel (0) target = $region5
    $region4: #{_policy_forward.1} parent=1 // pred_region
      _
    $region5: #{_policy_forward.1} parent=1 // pred_fallthru
      _
    // Predicated region
    $region6: #{_policy_forward.1} parent=1 // pred_check
      _
    $region7: #{_policy_forward.1} parent=1 // pred_check_branch
      %18 = sbr.rel (0) target = $region9
    $region8: #{_policy_forward.1} parent=1 // pred_region
      _
    $region9: #{_policy_forward.1} parent=1 // pred_fallthru
      _
    // Predicated region
    $region10: #{_policy_forward.1} parent=1 // pred_check
      _
    $region11: #{_policy_forward.1} parent=1 // pred_check_branch
      %20 = sbr.rel (0) target = $region13
    $region12: #{_policy_forward.1} parent=1 // pred_region
      _
    $region13: #{_policy_forward.1} parent=1 // pred_fallthru
      _
    // Predicated region
    $region14: #{_policy_forward.1} parent=1 // pred_check
      _
    $region15: #{_policy_forward.1} parent=1 // pred_check_branch
      %22 = sbr.rel (0) target = $region17
    $region16: #{_policy_forward.1} parent=1 // pred_region
      _
    $region17: #{_policy_forward.1} parent=1 // pred_fallthru
      _
    // Predicated region
    $region18: #{_policy_forward.1} parent=1 // pred_check
      _
    $region19: #{_policy_forward.1} parent=1 // pred_check_branch
      %24 = sbr.rel (0) target = $region21
    $region20: #{_policy_forward.1} parent=1 // pred_region
      _
    $region21: #{_policy_forward.1} parent=1 // pred_fallthru
      _
    // Predicated region
    $region22: #{_policy_forward.1} parent=1 // pred_check
      _
    $region23: #{_policy_forward.1} parent=1 // pred_check_branch
      %26 = sbr.rel (0) target = $region25
    $region24: #{_policy_forward.1} parent=1 // pred_region
      _
    $region25: #{_policy_forward.1} parent=1 // pred_fallthru
      _
    // Predicated region
    $region26: #{_policy_forward.1} parent=1 // pred_check
      _
    $region27: #{_policy_forward.1} parent=1 // pred_check_branch
      %28 = sbr.rel (0) target = $region29
    $region28: #{_policy_forward.1} parent=1 // pred_region
      _
    $region29: #{_policy_forward.1} parent=1 // pred_fallthru
      _
    // Predicated region
    $region30: #{_policy_forward.1} parent=1 // pred_check
      _
    $region31: #{_policy_forward.1} parent=1 // pred_check_branch
      %30 = sbr.rel (0) target = $region33
    $region32: #{_policy_forward.1} parent=1 // pred_region
      _
    $region33: #{_policy_forward.1} parent=1 // pred_fallthru
      _
    // Predicated region
    $region34: #{_policy_forward.1} parent=1 // pred_check
      _
    $region35: #{_policy_forward.1} parent=1 // pred_check_branch
      %32 = sbr.rel (0) target = $region37
    $region36: #{_policy_forward.1} parent=1 // pred_region
      _
    $region37: #{_policy_forward.1} parent=1 // pred_fallthru
      _
    %v33 = vld [vmem:[%s0] sm:$0xff]
    %v34 = vld [vmem:[%s1] sm:$0xff]
    %v35 = vld [vmem:[%s1 + $0x8] sm:$0xff]
    %v36 = vld [vmem:[%s2] sm:$0x1]
    %v38 = vlaneseq
    %v39 = vshrl.u32 %v38, 7
    %v40 = vsub.s32 0, %v39
    %v41 = vrot.slane %v36, %v40
    %vm43 = vcmask 130048
    %v45 = vsel %vm43, %v33, 0
    %47 = vmatprep.subr.mxu0 0.0
    %48 = vmatpush1.msra.mxu0 %v34
    %49 = vmatprep.subr.mxu0 0.0
    %50 = vmatpush1.msra.mxu0 %v35
    %51 = vmatprep.subr.mxu0 0.0
    %52 = vmatpush1.msra.mxu0 0.0
    %53 = vmatprep.subr.mxu0 0.0
    %54 = vmatpush1.msra.mxu0 0.0
    %55 = vmatprep.subr.mxu0 0.0
    %56 = vmatpush1.msra.mxu0 0.0
    %57 = vmatprep.subr.mxu0 0.0
    %58 = vmatpush1.msra.mxu0 0.0
    %59 = vmatprep.subr.mxu0 0.0
    %60 = vmatpush1.msra.mxu0 0.0
    %61 = vmatprep.subr.mxu0 0.0
    %62 = vmatpush1.msra.mxu0 0.0
    %63 = vmatprep.subr.mxu0 0.0
    %64 = vmatpush1.msra.mxu0 0.0
    %65 = vmatprep.subr.mxu0 0.0
    %66 = vmatpush1.msra.mxu0 0.0
    %67 = vmatprep.subr.mxu0 0.0
    %68 = vmatpush1.msra.mxu0 0.0
    %69 = vmatprep.subr.mxu0 0.0
    %70 = vmatpush1.msra.mxu0 0.0
    %71 = vmatprep.subr.mxu0 0.0
    %72 = vmatpush1.msra.mxu0 0.0
    %73 = vmatprep.subr.mxu0 0.0
    %74 = vmatpush1.msra.mxu0 0.0
    %75 = vmatprep.subr.mxu0 0.0
    %76 = vmatpush1.msra.mxu0 0.0
    %77 = vmatprep.subr.mxu0 0.0
    %78 = vmatpush1.msra.mxu0 0.0
    %79 = vmatprep.subr.mxu0 0.0
    %80 = vmatpush1.msra.mxu0 0.0
    %81 = vmatprep.subr.mxu0 0.0
    %82 = vmatpush1.msra.mxu0 0.0
    %83 = vmatprep.subr.mxu0 0.0
    %84 = vmatpush1.msra.mxu0 0.0
    %85 = vmatprep.subr.mxu0 0.0
    %86 = vmatpush1.msra.mxu0 0.0
    %87 = vmatprep.subr.mxu0 0.0
    %88 = vmatpush1.msra.mxu0 0.0
    %89 = vmatprep.subr.mxu0 0.0
    %90 = vmatpush1.msra.mxu0 0.0
    %91 = vmatprep.subr.mxu0 0.0
    %92 = vmatpush1.msra.mxu0 0.0
    %93 = vmatprep.subr.mxu0 0.0
    %94 = vmatpush1.msra.mxu0 0.0
    %95 = vmatprep.subr.mxu0 0.0
    %96 = vmatpush1.msra.mxu0 0.0
    %97 = vmatprep.subr.mxu0 0.0
    %98 = vmatpush1.msra.mxu0 0.0
    %99 = vmatprep.subr.mxu0 0.0
    %100 = vmatpush1.msra.mxu0 0.0
    %101 = vmatprep.subr.mxu0 0.0
    %102 = vmatpush1.msra.mxu0 0.0
    %103 = vmatprep.subr.mxu0 0.0
    %104 = vmatpush1.msra.mxu0 0.0
    %105 = vmatprep.subr.mxu0 0.0
    %106 = vmatpush1.msra.mxu0 0.0
    %107 = vmatprep.subr.mxu0 0.0
    %108 = vmatpush1.msra.mxu0 0.0
    %109 = vmatprep.subr.mxu0 0.0
    %110 = vmatpush1.msra.mxu0 0.0
    %111 = vmatprep.mubr.f32.mxu0 0.0
    %112 = vmatmul.mubr.f32.gmra.mrb[0].mxu0 %v45
    %v113 = vpop.f32.mrb[0].mxu0
    %v114 = vadd.f32 %v41, %v113
    %v115 = vpop.f32.mrb[0].mxu0
    %116 = vdwg.mxu0
    %v117 = vtanh.pop %v114
    %v118 = vld [vmem:[%s3] sm:$0xff]
    %v119 = vld [vmem:[%s3 + $0x8] sm:$0xff]
    %v120 = vld [vmem:[%s3 + $0x10] sm:$0xff]
    %v121 = vld [vmem:[%s3 + $0x18] sm:$0xff]
    %v122 = vld [vmem:[%s3 + $0x20] sm:$0xff]
    %v123 = vld [vmem:[%s3 + $0x28] sm:$0xff]
    %v124 = vld [vmem:[%s3 + $0x30] sm:$0xff]
    %v125 = vld [vmem:[%s3 + $0x38] sm:$0xff]
    %v126 = vld [vmem:[%s4] sm:$0x1]
    %v128 = vlaneseq
    %v129 = vshrl.u32 %v128, 7
    %v130 = vsub.s32 0, %v129
    %v131 = vrot.slane %v126, %v130
    %vm133 = vcmask 523264
    %v135 = vsel %vm133, %v117, 0
    %137 = vmatprep.subr.mxu0 0.0
    %138 = vmatpush1.msra.mxu0 %v118
    %139 = vmatprep.subr.mxu0 0.0
    %140 = vmatpush1.msra.mxu0 %v119
    %141 = vmatprep.subr.mxu0 0.0
    %142 = vmatpush1.msra.mxu0 %v120
    %143 = vmatprep.subr.mxu0 0.0
    %144 = vmatpush1.msra.mxu0 %v121
    %145 = vmatprep.subr.mxu0 0.0
    %146 = vmatpush1.msra.mxu0 %v122
    %147 = vmatprep.subr.mxu0 0.0
    %148 = vmatpush1.msra.mxu0 %v123
    %149 = vmatprep.subr.mxu0 0.0
    %150 = vmatpush1.msra.mxu0 %v124
    %151 = vmatprep.subr.mxu0 0.0
    %152 = vmatpush1.msra.mxu0 %v125
    %153 = vmatprep.subr.mxu0 0.0
    %154 = vmatpush1.msra.mxu0 0.0
    %155 = vmatprep.subr.mxu0 0.0
    %156 = vmatpush1.msra.mxu0 0.0
    %157 = vmatprep.subr.mxu0 0.0
    %158 = vmatpush1.msra.mxu0 0.0
    %159 = vmatprep.subr.mxu0 0.0
    %160 = vmatpush1.msra.mxu0 0.0
    %161 = vmatprep.subr.mxu0 0.0
    %162 = vmatpush1.msra.mxu0 0.0
    %163 = vmatprep.subr.mxu0 0.0
    %164 = vmatpush1.msra.mxu0 0.0
    %165 = vmatprep.subr.mxu0 0.0
    %166 = vmatpush1.msra.mxu0 0.0
    %167 = vmatprep.subr.mxu0 0.0
    %168 = vmatpush1.msra.mxu0 0.0
    %169 = vmatprep.subr.mxu0 0.0
    %170 = vmatpush1.msra.mxu0 0.0
    %171 = vmatprep.subr.mxu0 0.0
    %172 = vmatpush1.msra.mxu0 0.0
    %173 = vmatprep.subr.mxu0 0.0
    %174 = vmatpush1.msra.mxu0 0.0
    %175 = vmatprep.subr.mxu0 0.0
    %176 = vmatpush1.msra.mxu0 0.0
    %177 = vmatprep.subr.mxu0 0.0
    %178 = vmatpush1.msra.mxu0 0.0
    %179 = vmatprep.subr.mxu0 0.0
    %180 = vmatpush1.msra.mxu0 0.0
    %181 = vmatprep.subr.mxu0 0.0
    %182 = vmatpush1.msra.mxu0 0.0
    %183 = vmatprep.subr.mxu0 0.0
    %184 = vmatpush1.msra.mxu0 0.0
    %185 = vmatprep.subr.mxu0 0.0
    %186 = vmatpush1.msra.mxu0 0.0
    %187 = vmatprep.subr.mxu0 0.0
    %188 = vmatpush1.msra.mxu0 0.0
    %189 = vmatprep.subr.mxu0 0.0
    %190 = vmatpush1.msra.mxu0 0.0
    %191 = vmatprep.subr.mxu0 0.0
    %192 = vmatpush1.msra.mxu0 0.0
    %193 = vmatprep.subr.mxu0 0.0
    %194 = vmatpush1.msra.mxu0 0.0
    %195 = vmatprep.subr.mxu0 0.0
    %196 = vmatpush1.msra.mxu0 0.0
    %197 = vmatprep.subr.mxu0 0.0
    %198 = vmatpush1.msra.mxu0 0.0
    %199 = vmatprep.subr.mxu0 0.0
    %200 = vmatpush1.msra.mxu0 0.0
    %201 = vmatprep.mubr.f32.mxu0 0.0
    %202 = vmatmul.mubr.f32.gmra.mrb[0].mxu0 %v135
    %v203 = vpop.f32.mrb[0].mxu0
    %v204 = vadd.f32 %v131, %v203
    %v205 = vpop.f32.mrb[0].mxu0
    %206 = vdwg.mxu0
    %v207 = vtanh.pop %v204
    %v208 = vld [vmem:[%s5] sm:$0xff]
    %v209 = vld [vmem:[%s5 + $0x8] sm:$0xff]
    %v210 = vld [vmem:[%s5 + $0x10] sm:$0xff]
    %v211 = vld [vmem:[%s5 + $0x18] sm:$0xff]
    %v212 = vld [vmem:[%s5 + $0x20] sm:$0xff]
    %v213 = vld [vmem:[%s5 + $0x28] sm:$0xff]
    %v214 = vld [vmem:[%s5 + $0x30] sm:$0xff]
    %v215 = vld [vmem:[%s5 + $0x38] sm:$0xff]
    %v216 = vld [vmem:[%s5 + $0x40] sm:$0xff]
    %v217 = vld [vmem:[%s5 + $0x48] sm:$0xff]
    %v218 = vld [vmem:[%s5 + $0x50] sm:$0xff]
    %v219 = vld [vmem:[%s5 + $0x58] sm:$0xff]
    %v220 = vld [vmem:[%s5 + $0x60] sm:$0xff]
    %v221 = vld [vmem:[%s5 + $0x68] sm:$0xff]
    %v222 = vld [vmem:[%s5 + $0x70] sm:$0xff]
    %v223 = vld [vmem:[%s5 + $0x78] sm:$0xff]
    %v224 = vld [vmem:[%s6] sm:$0x1]
    %v226 = vlaneseq
    %v227 = vshrl.u32 %v226, 7
    %v228 = vsub.s32 0, %v227
    %v229 = vrot.slane %v224, %v228
    %231 = vmatprep.subr.mxu0 0.0
    %232 = vmatpush1.msra.mxu0 %v208
    %233 = vmatprep.subr.mxu0 0.0
    %234 = vmatpush1.msra.mxu0 %v209
    %235 = vmatprep.subr.mxu0 0.0
    %236 = vmatpush1.msra.mxu0 %v210
    %237 = vmatprep.subr.mxu0 0.0
    %238 = vmatpush1.msra.mxu0 %v211
    %239 = vmatprep.subr.mxu0 0.0
    %240 = vmatpush1.msra.mxu0 %v212
    %241 = vmatprep.subr.mxu0 0.0
    %242 = vmatpush1.msra.mxu0 %v213
    %243 = vmatprep.subr.mxu0 0.0
    %244 = vmatpush1.msra.mxu0 %v214
    %245 = vmatprep.subr.mxu0 0.0
    %246 = vmatpush1.msra.mxu0 %v215
    %247 = vmatprep.subr.mxu0 0.0
    %248 = vmatpush1.msra.mxu0 %v216
    %249 = vmatprep.subr.mxu0 0.0
    %250 = vmatpush1.msra.mxu0 %v217
    %251 = vmatprep.subr.mxu0 0.0
    %252 = vmatpush1.msra.mxu0 %v218
    %253 = vmatprep.subr.mxu0 0.0
    %254 = vmatpush1.msra.mxu0 %v219
    %255 = vmatprep.subr.mxu0 0.0
    %256 = vmatpush1.msra.mxu0 %v220
    %257 = vmatprep.subr.mxu0 0.0
    %258 = vmatpush1.msra.mxu0 %v221
    %259 = vmatprep.subr.mxu0 0.0
    %260 = vmatpush1.msra.mxu0 %v222
    %261 = vmatprep.subr.mxu0 0.0
    %262 = vmatpush1.msra.mxu0 %v223
    %263 = vmatprep.subr.mxu0 0.0
    %264 = vmatpush1.msra.mxu0 0.0
    %265 = vmatprep.subr.mxu0 0.0
    %266 = vmatpush1.msra.mxu0 0.0
    %267 = vmatprep.subr.mxu0 0.0
    %268 = vmatpush1.msra.mxu0 0.0
    %269 = vmatprep.subr.mxu0 0.0
    %270 = vmatpush1.msra.mxu0 0.0
    %271 = vmatprep.subr.mxu0 0.0
    %272 = vmatpush1.msra.mxu0 0.0
    %273 = vmatprep.subr.mxu0 0.0
    %274 = vmatpush1.msra.mxu0 0.0
    %275 = vmatprep.subr.mxu0 0.0
    %276 = vmatpush1.msra.mxu0 0.0
    %277 = vmatprep.subr.mxu0 0.0
    %278 = vmatpush1.msra.mxu0 0.0
    %279 = vmatprep.subr.mxu0 0.0
    %280 = vmatpush1.msra.mxu0 0.0
    %281 = vmatprep.subr.mxu0 0.0
    %282 = vmatpush1.msra.mxu0 0.0
    %283 = vmatprep.subr.mxu0 0.0
    %284 = vmatpush1.msra.mxu0 0.0
    %285 = vmatprep.subr.mxu0 0.0
    %286 = vmatpush1.msra.mxu0 0.0
    %287 = vmatprep.subr.mxu0 0.0
    %288 = vmatpush1.msra.mxu0 0.0
    %289 = vmatprep.subr.mxu0 0.0
    %290 = vmatpush1.msra.mxu0 0.0
    %291 = vmatprep.subr.mxu0 0.0
    %292 = vmatpush1.msra.mxu0 0.0
    %293 = vmatprep.subr.mxu0 0.0
    %294 = vmatpush1.msra.mxu0 0.0
    %295 = vmatprep.mubr.f32.mxu0 0.0
    %296 = vmatmul.mubr.f32.gmra.mrb[0].mxu0 %v207
    %v297 = vpop.f32.mrb[0].mxu0
    %v298 = vadd.f32 %v229, %v297
    %v299 = vpop.f32.mrb[0].mxu0
    %300 = vdwg.mxu0
    %v301 = vtanh.pop %v298
    %v302 = vld [vmem:[%s7] sm:$0xff]
    %v303 = vld [vmem:[%s7 + $0x8] sm:$0xff]
    %v304 = vld [vmem:[%s7 + $0x10] sm:$0xff]
    %v305 = vld [vmem:[%s7 + $0x18] sm:$0xff]
    %v306 = vld [vmem:[%s7 + $0x20] sm:$0xff]
    %v307 = vld [vmem:[%s7 + $0x28] sm:$0xff]
    %v308 = vld [vmem:[%s7 + $0x30] sm:$0xff]
    %v309 = vld [vmem:[%s7 + $0x38] sm:$0xff]
    %v310 = vld [vmem:[%s8] sm:$0x1]
    %v312 = vlaneseq
    %v313 = vshrl.u32 %v312, 7
    %v314 = vsub.s32 0, %v313
    %v315 = vrot.slane %v310, %v314
    %v318 = vsel %vm133, %v301, 0
    %320 = vmatprep.subr.mxu0 0.0
    %321 = vmatpush1.msra.mxu0 %v302
    %322 = vmatprep.subr.mxu0 0.0
    %323 = vmatpush1.msra.mxu0 %v303
    %324 = vmatprep.subr.mxu0 0.0
    %325 = vmatpush1.msra.mxu0 %v304
    %326 = vmatprep.subr.mxu0 0.0
    %327 = vmatpush1.msra.mxu0 %v305
    %328 = vmatprep.subr.mxu0 0.0
    %329 = vmatpush1.msra.mxu0 %v306
    %330 = vmatprep.subr.mxu0 0.0
    %331 = vmatpush1.msra.mxu0 %v307
    %332 = vmatprep.subr.mxu0 0.0
    %333 = vmatpush1.msra.mxu0 %v308
    %334 = vmatprep.subr.mxu0 0.0
    %335 = vmatpush1.msra.mxu0 %v309
    %336 = vmatprep.subr.mxu0 0.0
    %337 = vmatpush1.msra.mxu0 0.0
    %338 = vmatprep.subr.mxu0 0.0
    %339 = vmatpush1.msra.mxu0 0.0
    %340 = vmatprep.subr.mxu0 0.0
    %341 = vmatpush1.msra.mxu0 0.0
    %342 = vmatprep.subr.mxu0 0.0
    %343 = vmatpush1.msra.mxu0 0.0
    %344 = vmatprep.subr.mxu0 0.0
    %345 = vmatpush1.msra.mxu0 0.0
    %346 = vmatprep.subr.mxu0 0.0
    %347 = vmatpush1.msra.mxu0 0.0
    %348 = vmatprep.subr.mxu0 0.0
    %349 = vmatpush1.msra.mxu0 0.0
    %350 = vmatprep.subr.mxu0 0.0
    %351 = vmatpush1.msra.mxu0 0.0
    %352 = vmatprep.subr.mxu0 0.0
    %353 = vmatpush1.msra.mxu0 0.0
    %354 = vmatprep.subr.mxu0 0.0
    %355 = vmatpush1.msra.mxu0 0.0
    %356 = vmatprep.subr.mxu0 0.0
    %357 = vmatpush1.msra.mxu0 0.0
    %358 = vmatprep.subr.mxu0 0.0
    %359 = vmatpush1.msra.mxu0 0.0
    %360 = vmatprep.subr.mxu0 0.0
    %361 = vmatpush1.msra.mxu0 0.0
    %362 = vmatprep.subr.mxu0 0.0
    %363 = vmatpush1.msra.mxu0 0.0
    %364 = vmatprep.subr.mxu0 0.0
    %365 = vmatpush1.msra.mxu0 0.0
    %366 = vmatprep.subr.mxu0 0.0
    %367 = vmatpush1.msra.mxu0 0.0
    %368 = vmatprep.subr.mxu0 0.0
    %369 = vmatpush1.msra.mxu0 0.0
    %370 = vmatprep.subr.mxu0 0.0
    %371 = vmatpush1.msra.mxu0 0.0
    %372 = vmatprep.subr.mxu0 0.0
    %373 = vmatpush1.msra.mxu0 0.0
    %374 = vmatprep.subr.mxu0 0.0
    %375 = vmatpush1.msra.mxu0 0.0
    %376 = vmatprep.subr.mxu0 0.0
    %377 = vmatpush1.msra.mxu0 0.0
    %378 = vmatprep.subr.mxu0 0.0
    %379 = vmatpush1.msra.mxu0 0.0
    %380 = vmatprep.subr.mxu0 0.0
    %381 = vmatpush1.msra.mxu0 0.0
    %382 = vmatprep.subr.mxu0 0.0
    %383 = vmatpush1.msra.mxu0 0.0
    %384 = vmatprep.mubr.f32.mxu0 0.0
    %385 = vmatmul.mubr.f32.gmra.mrb[0].mxu0 %v318
    %v386 = vpop.f32.mrb[0].mxu0
    %v387 = vadd.f32 %v315, %v386
    %v388 = vpop.f32.mrb[0].mxu0
    %389 = vdwg.mxu0
    %vm390 = vcmask 64512
    %391 = vst.msk [vmem:[#allocation2] sm:$0xff] %vm390, %v387
    // Predicated region
    $region38: #{_policy_forward.1} parent=1 // pred_check
      _
    $region39: #{_policy_forward.1} parent=1 // pred_check_branch
      %393 = sbr.rel (0) target = $region41
    $region40: #{_policy_forward.1} parent=1 // pred_region
      %s395 = ssub.s32 128, 64
      %396 = vsyncadd [#allocation3], %s395
      %s397 = sshll.u32 [#allocation2], 4
      %s398 = int_to_ptr.vmem [resolvable:$true] %s397
      %403 = dma.vmem_to_hbm [thread:$0]  %s398, 64, %s9, [#allocation3], 64, 64, 4
    $region41: #{_policy_forward.1} parent=1 // pred_fallthru
      _
    // Predicated region
    $region42: #{_policy_forward.1} parent=1 // pred_check
      _
    $region43: #{_policy_forward.1} parent=1 // pred_check_branch
      %405 = sbr.rel (0) target = $region45
    $region44: #{_policy_forward.1} parent=1 // pred_region
      %406 = dma.done [#allocation3], 128
    $region45: #{_policy_forward.1} parent=1 // pred_fallthru
      _
    %407 = vsyncpa [#allocation3], 1

</llo_original>
